<compile_context>
chip_gen: v5e
topology: v5e:2x2
jax: 0.10.0
libtpu: 0.0.40
codegen_flags: <defaults>
</compile_context>

<pallas_src>
import functools

import jax
import jax.numpy as jnp
from jax.experimental import pallas as pl
from jax.experimental.pallas import tpu as pltpu

# Hyper-parameters from Ralloss.__init__ (defaults). The focal-weight rewrite
# and the single-log trick in the kernel assume gamma_pos == 0, gamma_neg == 4
# and binarized (0/1) targets, exactly as the PyTorch forward documents.
GAMMA_NEG = 4.0
GAMMA_POS = 0.0
CLIP = 0.05
EPS = 1e-8
LAMB = 1.5
EPSILON_NEG = 0.0            # == 0 -> its term is dropped in the kernel
EPSILON_POS = 1.0
EPSILON_POS_POW = -2.5
_POS_POW_HALF = EPSILON_POS_POW * 0.5   # pre-folded constant (-1.25)

# Padding logit so padded positions contribute exactly zero loss:
#   sigmoid(-1e30) == 0 -> los_pos = 0 (y_pad = 0), los_neg = log(1)*0*... = 0,
#   focal weight = (1 - 1)^4 = 0.
_PAD_LOGIT = -1e30


def _ralloss_kernel(x_ref, y_ref, out_ref, acc_ref):
    j = pl.program_id(1)
    nj = pl.num_programs(1)

    # Reset the per-row (8, tn) accumulator at the start of each grid row.
    @pl.when(j == 0)
    def _():
        acc_ref[...] = jnp.zeros_like(acc_ref)

    x = x_ref[...].astype(jnp.float32)
    y = y_ref[...].astype(jnp.float32)

    s = jax.nn.sigmoid(x)                                  # xs_pos
    xs_neg = jnp.minimum((1.0 - s) + CLIP, 1.0)            # clip > 0 branch
    xp = jnp.maximum(s, EPS)                               # xs_pos.clamp(min=eps)
    xn = jnp.maximum(xs_neg, EPS)                          # xs_neg.clamp(min=eps)

    # Binarized targets: log(xp) is only consumed by the y==1 branch and
    # log(xn) only by the y==0 branch, so one select + one EUP log replaces
    # two logs per element.
    is_pos = y > 0.0
    log_z = jnp.log(jnp.where(is_pos, xp, xn))

    one_m_xp = 1.0 - xp
    los_pos = y * (log_z + EPSILON_POS * one_m_xp
                   + _POS_POW_HALF * one_m_xp * one_m_xp)
    # EPSILON_NEG == 0 -> the '+ epsilon_neg * xn' term is dropped.
    los_neg = ((1.0 - y) * log_z
               * (LAMB - s) * (s * s) * (LAMB - xs_neg))

    # Asymmetric focusing weight with compile-time gammas (binary targets):
    #   y == 1 -> (1 - xs_pos)^gamma_pos = (.)^0 = 1   (scales los_pos; los_neg == 0)
    #   y == 0 -> (1 - xs_neg)^gamma_neg = (1 - xs_neg)^4 (scales los_neg; los_pos == 0)
    # Two VPU squarings on the negative branch instead of a variable-exponent
    # pow (EUP), which also avoids pow(0, 0) -> NaN when sigmoid saturates.
    w_neg = jnp.square(jnp.square(1.0 - xs_neg))
    loss = los_pos + los_neg * w_neg

    # Fold the (tm, tn) block into the (8, tn) accumulator using only VPU adds
    # (static, 8-aligned sublane slices; no XLU / scalar RMW per step).
    tm = loss.shape[0]
    folded = loss[0:8, :]
    for r in range(1, tm // 8):
        folded = folded + loss[r * 8:(r + 1) * 8, :]
    acc_ref[...] += folded

    # Finalize once per grid row: a single cross-lane reduce + a lane-dense
    # unmasked store of this row's (negated) partial sum.
    @pl.when(j == nj - 1)
    def _():
        total = jnp.sum(acc_ref[...])
        out_ref[...] = jnp.full(out_ref.shape, -total, dtype=out_ref.dtype)


def _round_up(a, b):
    return (a + b - 1) // b * b


def _pick_tile(dim, unit, max_tile):
    """Tile size: multiple of `unit`, <= max_tile, preferring exact coverage."""
    base = _round_up(max(dim, 1), unit)
    max_tile = max(unit, (max_tile // unit) * unit)
    if base <= max_tile:
        return base
    # Prefer a tile that divides the (unit-)padded extent exactly, but do not
    # shrink below max_tile // 4 just to avoid a little padding.
    t = max_tile
    while t >= max(unit, max_tile // 4):
        if base % t == 0:
            return t
        t -= unit
    return max_tile


def _sublane_unit(dtype):
    # (8, 128) min tile for 32-bit, (16, 128) for 16-bit, (32, 128) for 8-bit.
    return {4: 8, 2: 16, 1: 32}.get(dtype.itemsize, 8)


@functools.partial(jax.jit, static_argnames=("tm_max", "tn_max"))
def ralloss(x, y, *, tm_max=512, tn_max=2048):
    """Pallas Ralloss forward; returns scalar -sum(loss) (matches PyTorch)."""
    assert x.ndim == 2 and x.shape == y.shape
    M, N = x.shape

    unit_m = max(_sublane_unit(x.dtype), _sublane_unit(y.dtype))

    # Lane-contiguous blocks, capped at ~2 MiB of f32 per input block so the
    # double-buffered footprint (2 inputs x 2 buffers) stays well inside the
    # scoped VMEM budget on every TPU generation (incl. v7x's 64 MiB VMEM).
    tn = _pick_tile(N, 128, tn_max)
    tm_budget = max(unit_m, ((2 * 1024 * 1024 // 4) // tn) // unit_m * unit_m)
    tm = _pick_tile(M, unit_m, min(tm_max, tm_budget))

    M_pad = _round_up(M, tm)
    N_pad = _round_up(N, tn)
    if (M_pad, N_pad) != (M, N):
        # Loss-neutral padding (see _PAD_LOGIT) instead of in-kernel masking.
        x = jnp.pad(x, ((0, M_pad - M), (0, N_pad - N)),
                    constant_values=_PAD_LOGIT)
        y = jnp.pad(y, ((0, M_pad - M), (0, N_pad - N)))

    grid = (M_pad // tm, N_pad // tn)
    num_i = grid[0]

    elems = M_pad * N_pad
    cost = pl.CostEstimate(
        flops=30 * elems,
        transcendentals=3 * elems,
        bytes_accessed=int(elems * (x.dtype.itemsize + y.dtype.itemsize)
                           + num_i * 8 * 128 * 4),
    )

    out = pl.pallas_call(
        _ralloss_kernel,
        out_shape=jax.ShapeDtypeStruct((num_i, 8, 128), jnp.float32),
        grid_spec=pltpu.PrefetchScalarGridSpec(
            num_scalar_prefetch=0,
            grid=grid,
            in_specs=[
                pl.BlockSpec((tm, tn), lambda i, j: (i, j)),
                pl.BlockSpec((tm, tn), lambda i, j: (i, j)),
            ],
            out_specs=pl.BlockSpec((1, 8, 128), lambda i, j: (i, 0, 0)),
            scratch_shapes=[pltpu.VMEM((8, tn), jnp.float32)],
        ),
        compiler_params=pltpu.CompilerParams(
            # Row axis writes disjoint partial outputs -> shardable across the
            # two TensorCores on v7x; label axis is the in-row reduction axis.
            dimension_semantics=("parallel", "arbitrary"),
            vmem_limit_bytes=32 * 1024 * 1024,
        ),
        cost_estimate=cost,
    )(x, y)

    # Each row slab holds that grid row's negated partial sum (broadcast over
    # the slab); read one element per row and finish the tiny reduction here.
    return jnp.sum(out[:, 0, 0])


def _ralloss_ref(x, y):
    """Pure-JAX reference, faithful to the PyTorch forward."""
    x = x.astype(jnp.float32)
    y = y.astype(jnp.float32)
    x_sigmoid = jax.nn.sigmoid(x)
    xs_pos = x_sigmoid
    xs_neg = jnp.minimum(1.0 - x_sigmoid + CLIP, 1.0)
    xp = jnp.maximum(xs_pos, EPS)
    xn = jnp.maximum(xs_neg, EPS)
    los_pos = y * (jnp.log(xp) + EPSILON_POS * (1.0 - xp)
                   + EPSILON_POS_POW * 0.5 * jnp.square(1.0 - xp))
    los_neg = ((1.0 - y) * (jnp.log(xn) + EPSILON_NEG * xn)
               * (LAMB - x_sigmoid) * jnp.square(x_sigmoid) * (LAMB - xs_neg))
    loss = los_pos + los_neg
    pt = xs_pos * y + xs_neg * (1.0 - y)
    gamma = GAMMA_POS * y + GAMMA_NEG * (1.0 - y)
    loss = loss * jnp.power(1.0 - pt, gamma)
    return -jnp.sum(loss)


if __name__ == "__main__":
    root = jax.random.PRNGKey(0)

    def _check(k, shape, dtype, rtol=1e-4, atol=1e-2, **kw):
        kx, ky = jax.random.split(k)
        x = (jax.random.normal(kx, shape) * 2.0).astype(dtype)
        y = jax.random.bernoulli(ky, p=0.3, shape=shape).astype(dtype)
        out = jax.block_until_ready(ralloss(x, y, **kw))
        ref = _ralloss_ref(x, y)
        assert jnp.allclose(out, ref, rtol=rtol, atol=atol), (shape, dtype, out, ref)

    k1, k2, k3, k4 = jax.random.split(root, 4)
    # (8,128)-aligned f32 case.
    _check(k1, (16, 256), jnp.float32)
    # Unaligned shape -> exercises the loss-neutral padding path.
    _check(k2, (13, 200), jnp.float32)
    # bf16 inputs (half HBM traffic; kernel computes in f32 after the DMA).
    _check(k3, (32, 384), jnp.bfloat16)
    # Force a multi-block (4, 4) grid to exercise reset/accumulate/finalize
    # and the per-row partial outputs.
    _check(k4, (64, 512), jnp.float32, tm_max=16, tn_max=128)

    print("KERNEL_OK")
</pallas_src>

<mosaic_0001>
module attributes {stable_mosaic.version = 11 : i64} {
  func.func @_ralloss_kernel(%arg0: i32, %arg1: i32, %arg2: memref<16x256xf32, #tpu.memory_space<vmem>>, %arg3: memref<16x256xf32, #tpu.memory_space<vmem>>, %arg4: memref<1x8x128xf32, #tpu.memory_space<vmem>>, %arg5: memref<8x256xf32, #tpu.memory_space<vmem>>) attributes {dimension_semantics = [#tpu.dimension_semantics<parallel>, #tpu.dimension_semantics<arbitrary>], iteration_bounds = array<i64: 1, 1>, scalar_prefetch = 0 : i64, scratch_operands = 1 : i64, tpu.core_type = #tpu.core_type<tc>, window_params = [{transform_indices = @transform_0, window_bounds = array<i64: 16, 256>}, {transform_indices = @transform_1, window_bounds = array<i64: 16, 256>}, {transform_indices = @transform_2, window_bounds = array<i64: 1, 8, 128>}]} {
    %c0_i32 = arith.constant 0 : i32
    %0 = arith.cmpi eq, %arg1, %c0_i32 : i32
    %1 = arith.extui %0 : i1 to i32
    %c0_i32_0 = arith.constant 0 : i32
    %2 = arith.cmpi ne, %1, %c0_i32_0 : i32
    scf.if %2 {
      %cst_23 = arith.constant 0.000000e+00 : f32
      %60 = vector.broadcast %cst_23 : f32 to vector<8x256xf32>
      %c0_24 = arith.constant 0 : index
      %c0_25 = arith.constant 0 : index
      %61 = vector.load %arg5[%c0_24, %c0_25] : memref<8x256xf32, #tpu.memory_space<vmem>>, vector<8x256xf32>
      tpu.vector_store %arg5[%c0_24, %c0_25], %60 {strides = array<i32>} : memref<8x256xf32, #tpu.memory_space<vmem>>, vector<8x256xf32>,
    } else {
    }
    %c0 = arith.constant 0 : index
    %c0_1 = arith.constant 0 : index
    %3 = vector.load %arg2[%c0, %c0_1] : memref<16x256xf32, #tpu.memory_space<vmem>>, vector<16x256xf32>
    %c0_2 = arith.constant 0 : index
    %c0_3 = arith.constant 0 : index
    %4 = vector.load %arg3[%c0_2, %c0_3] : memref<16x256xf32, #tpu.memory_space<vmem>>, vector<16x256xf32>
    %5 = arith.negf %3 : vector<16x256xf32>
    %6 = math.exp %5 : vector<16x256xf32>
    %cst = arith.constant 1.000000e+00 : f32
    %7 = vector.broadcast %cst : f32 to vector<16x256xf32>
    %8 = arith.addf %7, %6 : vector<16x256xf32>
    %9 = arith.divf %7, %8 : vector<16x256xf32>
    %cst_4 = arith.constant 1.000000e+00 : f32
    %10 = vector.broadcast %cst_4 : f32 to vector<16x256xf32>
    %11 = arith.subf %10, %9 : vector<16x256xf32>
    %cst_5 = arith.constant 5.000000e-02 : f32
    %12 = vector.broadcast %cst_5 : f32 to vector<16x256xf32>
    %13 = arith.addf %11, %12 : vector<16x256xf32>
    %cst_6 = arith.constant 1.000000e+00 : f32
    %14 = vector.broadcast %cst_6 : f32 to vector<16x256xf32>
    %15 = arith.minimumf %13, %14 : vector<16x256xf32>
    %cst_7 = arith.constant 9.99999993E-9 : f32
    %16 = vector.broadcast %cst_7 : f32 to vector<16x256xf32>
    %17 = arith.maximumf %9, %16 : vector<16x256xf32>
    %cst_8 = arith.constant 9.99999993E-9 : f32
    %18 = vector.broadcast %cst_8 : f32 to vector<16x256xf32>
    %19 = arith.maximumf %15, %18 : vector<16x256xf32>
    %cst_9 = arith.constant 0.000000e+00 : f32
    %20 = vector.broadcast %cst_9 : f32 to vector<16x256xf32>
    %21 = arith.cmpf ogt, %4, %20 : vector<16x256xf32>
    %22 = arith.select %21, %17, %19 : vector<16x256xi1>, vector<16x256xf32>
    %23 = math.log %22 : vector<16x256xf32>
    %cst_10 = arith.constant 1.000000e+00 : f32
    %24 = vector.broadcast %cst_10 : f32 to vector<16x256xf32>
    %25 = arith.subf %24, %17 : vector<16x256xf32>
    %cst_11 = arith.constant 1.000000e+00 : f32
    %26 = vector.broadcast %cst_11 : f32 to vector<16x256xf32>
    %27 = arith.mulf %26, %25 : vector<16x256xf32>
    %28 = arith.addf %23, %27 : vector<16x256xf32>
    %cst_12 = arith.constant -1.250000e+00 : f32
    %29 = vector.broadcast %cst_12 : f32 to vector<16x256xf32>
    %30 = arith.mulf %29, %25 : vector<16x256xf32>
    %31 = arith.mulf %30, %25 : vector<16x256xf32>
    %32 = arith.addf %28, %31 : vector<16x256xf32>
    %33 = arith.mulf %4, %32 : vector<16x256xf32>
    %cst_13 = arith.constant 1.000000e+00 : f32
    %34 = vector.broadcast %cst_13 : f32 to vector<16x256xf32>
    %35 = arith.subf %34, %4 : vector<16x256xf32>
    %36 = arith.mulf %35, %23 : vector<16x256xf32>
    %cst_14 = arith.constant 1.500000e+00 : f32
    %37 = vector.broadcast %cst_14 : f32 to vector<16x256xf32>
    %38 = arith.subf %37, %9 : vector<16x256xf32>
    %39 = arith.mulf %36, %38 : vector<16x256xf32>
    %40 = arith.mulf %9, %9 : vector<16x256xf32>
    %41 = arith.mulf %39, %40 : vector<16x256xf32>
    %cst_15 = arith.constant 1.500000e+00 : f32
    %42 = vector.broadcast %cst_15 : f32 to vector<16x256xf32>
    %43 = arith.subf %42, %15 : vector<16x256xf32>
    %44 = arith.mulf %41, %43 : vector<16x256xf32>
    %cst_16 = arith.constant 1.000000e+00 : f32
    %45 = vector.broadcast %cst_16 : f32 to vector<16x256xf32>
    %46 = arith.subf %45, %15 : vector<16x256xf32>
    %47 = arith.mulf %46, %46 : vector<16x256xf32>
    %48 = arith.mulf %47, %47 : vector<16x256xf32>
    %49 = arith.mulf %44, %48 : vector<16x256xf32>
    %50 = arith.addf %33, %49 : vector<16x256xf32>
    %51 = vector.extract_strided_slice %50 {offsets = [0, 0], sizes = [8, 256], strides = [1, 1]} : vector<16x256xf32> to vector<8x256xf32>
    %52 = vector.extract_strided_slice %50 {offsets = [8, 0], sizes = [8, 256], strides = [1, 1]} : vector<16x256xf32> to vector<8x256xf32>
    %53 = arith.addf %51, %52 : vector<8x256xf32>
    %c0_17 = arith.constant 0 : index
    %c0_18 = arith.constant 0 : index
    %54 = vector.load %arg5[%c0_17, %c0_18] : memref<8x256xf32, #tpu.memory_space<vmem>>, vector<8x256xf32>
    %55 = arith.addf %54, %53 : vector<8x256xf32>
    %c0_19 = arith.constant 0 : index
    %c0_20 = arith.constant 0 : index
    %56 = vector.load %arg5[%c0_19, %c0_20] : memref<8x256xf32, #tpu.memory_space<vmem>>, vector<8x256xf32>
    tpu.vector_store %arg5[%c0_19, %c0_20], %55 {strides = array<i32>} : memref<8x256xf32, #tpu.memory_space<vmem>>, vector<8x256xf32>,
    %c0_i32_21 = arith.constant 0 : i32
    %57 = arith.cmpi eq, %arg1, %c0_i32_21 : i32
    %58 = arith.extui %57 : i1 to i32
    %c0_i32_22 = arith.constant 0 : i32
    %59 = arith.cmpi ne, %58, %c0_i32_22 : i32
    scf.if %59 {
      %c0_23 = arith.constant 0 : index
      %c0_24 = arith.constant 0 : index
      %60 = vector.load %arg5[%c0_23, %c0_24] : memref<8x256xf32, #tpu.memory_space<vmem>>, vector<8x256xf32>
      %61 = vector.shape_cast %60 : vector<8x256xf32> to vector<1x8x256xf32>
      %cst_25 = arith.constant dense<0.000000e+00> : vector<1xf32>
      %62 = vector.multi_reduction <add>, %61, %cst_25 [1, 2] : vector<1x8x256xf32> to vector<1xf32>
      %63 = vector.shape_cast %62 : vector<1xf32> to vector<1x1x1xf32>
      %64 = vector.extract %63[0, 0, 0] : f32 from vector<1x1x1xf32>
      %cst_26 = arith.constant 0.000000e+00 : f32
      %65 = arith.subf %cst_26, %64 : f32
      %66 = vector.broadcast %65 : f32 to vector<1x8x128xf32>
      %c0_27 = arith.constant 0 : index
      %c0_28 = arith.constant 0 : index
      %c0_29 = arith.constant 0 : index
      %67 = vector.load %arg4[%c0_27, %c0_28, %c0_29] : memref<1x8x128xf32, #tpu.memory_space<vmem>>, vector<1x8x128xf32>
      tpu.vector_store %arg4[%c0_27, %c0_28, %c0_29], %66 {strides = array<i32>} : memref<1x8x128xf32, #tpu.memory_space<vmem>>, vector<1x8x128xf32>,
    } else {
    }
    return
  }
  func.func @transform_0(%arg0: i32, %arg1: i32) -> (i32, i32) {
    %c0_i32 = arith.constant 0 : i32
    return %arg0, %arg1 : i32, i32
  }
  func.func @transform_1(%arg0: i32, %arg1: i32) -> (i32, i32) {
    %c0_i32 = arith.constant 0 : i32
    return %arg0, %arg1 : i32, i32
  }
  func.func @transform_2(%arg0: i32, %arg1: i32) -> (i32, i32, i32) {
    %c0_i32 = arith.constant 0 : i32
    %c0_i32_0 = arith.constant 0 : i32
    %c0_i32_1 = arith.constant 0 : i32
    return %arg0, %c0_i32, %c0_i32_0 : i32, i32, i32
  }
}

</mosaic_0001>

<llo_original>
// kernel: ralloss.1
$region0: #{ralloss.1}
  #allocation0 [shape = 'u32[]', space=smem, size = 0x4, offset = 0x4, fixed_abs, tag = 'smem constant byte address 0x4 - core index']
  #allocation1 [shape = 'u32[72,128]{1,0:T(1,128)}', space=vmem, size = 0x9000, scoped, tag = 'internal scratch']
  #allocation2 [shape = 'f32[8,256]{1,0:T(8,128)}', space=vmem, size = 0x2000, scoped, tag = 'scratch operand']
  %s0 = inlined_call_operand.hbm [shape: f32[16,256], index: 0, kind: input, shape index: {}]
  %s1 = inlined_call_operand.hbm [shape: f32[16,256], index: 1, kind: input, shape index: {}]
  %s2 = inlined_call_operand.vmem [shape: f32[1,8,128], index: 2, kind: output, shape index: {}]
  %s3 = sld [smem:[#allocation0]]
  $region34: #{ralloss.1} parent=0
    _
  %s5 = ssub.s32 1, %s3
  %s6 = scalar_select 0, %s5, %s3
  $region1: #{ralloss.1} parent=0
    #allocation3 [shape = 'u8[16384]{0}', space=vmem, size = 0x4000, scoped, tag = 'input window, operand 0, single buffered']
    #allocation4 [shape = 's32[1]{0}', space=sflag, size = 0x4, scoped, tag = 'scoped memory for ralloss.1']
    #allocation5 [shape = 'u8[16384]{0}', space=vmem, size = 0x4000, scoped, tag = 'input window, operand 1, single buffered']
    #allocation6 [shape = 's32[1]{0}', space=sflag, size = 0x4, scoped, tag = 'scoped memory for ralloss.1']
    %7 = vsyncpa [#allocation4], 0
    %8 = vsyncpa [#allocation6], 0
    // Predicated region
    $region2: #{ralloss.1} parent=1 // pred_check
      _
    $region3: #{ralloss.1} parent=1 // pred_check_branch
      %10 = sbr.rel (0) target = $region5
    $region4: #{ralloss.1} parent=1 // pred_region
      %12 = vsyncadd [#allocation4], 0
      %s13 = sshll.u32 %s0, 4
      %s14 = int_to_ptr.hbm [resolvable:$true] %s13
      %s15 = sshll.u32 [#allocation3], 4
      %s16 = int_to_ptr.vmem [resolvable:$true] %s15
      %21 = dma.hbm_to_vmem [thread:$0]  %s14, 512, %s16, [#allocation4], 256, 256, 16
    $region5: #{ralloss.1} parent=1 // pred_fallthru
      _
    // Predicated region
    $region6: #{ralloss.1} parent=1 // pred_check
      _
    $region7: #{ralloss.1} parent=1 // pred_check_branch
      %23 = sbr.rel (0) target = $region9
    $region8: #{ralloss.1} parent=1 // pred_region
      %25 = vsyncadd [#allocation6], 0
      %s26 = sshll.u32 %s1, 4
      %s27 = int_to_ptr.hbm [resolvable:$true] %s26
      %s28 = sshll.u32 [#allocation5], 4
      %s29 = int_to_ptr.vmem [resolvable:$true] %s28
      %34 = dma.hbm_to_vmem [thread:$0]  %s27, 512, %s29, [#allocation6], 256, 256, 16
    $region9: #{ralloss.1} parent=1 // pred_fallthru
      _
    // Predicated region
    $region10: #{ralloss.1} parent=1 // pred_check
      _
    $region11: #{ralloss.1} parent=1 // pred_check_branch
      %36 = sbr.rel (0) target = $region13
    $region12: #{ralloss.1} parent=1 // pred_region
      %38 = dma.done [#allocation4], 512
    $region13: #{ralloss.1} parent=1 // pred_fallthru
      _
    // Predicated region
    $region14: #{ralloss.1} parent=1 // pred_check
      _
    $region15: #{ralloss.1} parent=1 // pred_check_branch
      %40 = sbr.rel (0) target = $region17
    $region16: #{ralloss.1} parent=1 // pred_region
      %42 = dma.done [#allocation6], 512
    $region17: #{ralloss.1} parent=1 // pred_fallthru
      _
    %p43 = scmp.eq.s32.totalorder 0, 0
    // Predicated region
    $region18: #{ralloss.1} parent=1 // pred_check
      %p44 = pneg %p43
    $region19: #{ralloss.1} parent=1 // pred_check_branch
      %46 = sbr.rel (%p44) target = $region21
    $region20: #{ralloss.1} parent=1 // pred_region
      %47 = vst [vmem:[#allocation2] sm:$0xff] 0.0
      %48 = vst [vmem:[#allocation2 + $0x8] sm:$0xff] 0.0
    $region21: #{ralloss.1} parent=1 // pred_fallthru
      _
    %v49 = vld [vmem:[#allocation3] sm:$0xff]
    %v50 = vld [vmem:[#allocation3 + $0x8] sm:$0xff]
    %v51 = vld [vmem:[#allocation3 + $0x10] sm:$0xff]
    %v52 = vld [vmem:[#allocation3 + $0x18] sm:$0xff]
    %v53 = vld [vmem:[#allocation5] sm:$0xff]
    %v54 = vld [vmem:[#allocation5 + $0x8] sm:$0xff]
    %v55 = vld [vmem:[#allocation5 + $0x10] sm:$0xff]
    %v56 = vld [vmem:[#allocation5 + $0x18] sm:$0xff]
    %v57 = vxor.u32 %v49, 2147483648
    %v58 = vxor.u32 %v50, 2147483648
    %v59 = vxor.u32 %v51, 2147483648
    %v60 = vxor.u32 %v52, 2147483648
    %v61 = vmul.f32 %v57, 1.442695
    %v62 = vpow.pop %v61
    %v63 = vmul.f32 %v58, 1.442695
    %v64 = vpow.pop %v63
    %v65 = vmul.f32 %v59, 1.442695
    %v66 = vpow.pop %v65
    %v67 = vmul.f32 %v60, 1.442695
    %v68 = vpow.pop %v67
    %v69 = vadd.f32 %v62, 1.0
    %v70 = vadd.f32 %v64, 1.0
    %v71 = vadd.f32 %v66, 1.0
    %v72 = vadd.f32 %v68, 1.0
    %v73 = vrcp.pop %v69
    %v74 = vmul.f32 %v69, %v73
    %v75 = vsub.f32 1.0, %v74
    %v76 = vmul.f32 %v73, %v75
    %v77 = vadd.f32 %v73, %v76
    %vm78 = vweird.f32 %v69
    %vm79 = vweird.f32 %v73
    %vm80 = vmor %vm78, %vm79
    %v81 = vsel %vm80, %v73, %v77
    %v82 = vand.u32 2147483647, %v69
    %vm83 = vcmp.eq.f32.partialorder %v82, 8.507059e+37
    %v84 = vand.u32 %v69, 2147483648
    %v85 = vor.u32 1.1754944e-38, %v84
    %v86 = vsel %vm83, %v85, %v81
    %v87 = vmul.f32 1.0, %v86
    %v88 = vrcp.pop %v70
    %v89 = vmul.f32 %v70, %v88
    %v90 = vsub.f32 1.0, %v89
    %v91 = vmul.f32 %v88, %v90
    %v92 = vadd.f32 %v88, %v91
    %vm93 = vweird.f32 %v70
    %vm94 = vweird.f32 %v88
    %vm95 = vmor %vm93, %vm94
    %v96 = vsel %vm95, %v88, %v92
    %v97 = vand.u32 2147483647, %v70
    %vm98 = vcmp.eq.f32.partialorder %v97, 8.507059e+37
    %v99 = vand.u32 %v70, 2147483648
    %v100 = vor.u32 1.1754944e-38, %v99
    %v101 = vsel %vm98, %v100, %v96
    %v102 = vmul.f32 1.0, %v101
    %v103 = vrcp.pop %v71
    %v104 = vmul.f32 %v71, %v103
    %v105 = vsub.f32 1.0, %v104
    %v106 = vmul.f32 %v103, %v105
    %v107 = vadd.f32 %v103, %v106
    %vm108 = vweird.f32 %v71
    %vm109 = vweird.f32 %v103
    %vm110 = vmor %vm108, %vm109
    %v111 = vsel %vm110, %v103, %v107
    %v112 = vand.u32 2147483647, %v71
    %vm113 = vcmp.eq.f32.partialorder %v112, 8.507059e+37
    %v114 = vand.u32 %v71, 2147483648
    %v115 = vor.u32 1.1754944e-38, %v114
    %v116 = vsel %vm113, %v115, %v111
    %v117 = vmul.f32 1.0, %v116
    %v118 = vrcp.pop %v72
    %v119 = vmul.f32 %v72, %v118
    %v120 = vsub.f32 1.0, %v119
    %v121 = vmul.f32 %v118, %v120
    %v122 = vadd.f32 %v118, %v121
    %vm123 = vweird.f32 %v72
    %vm124 = vweird.f32 %v118
    %vm125 = vmor %vm123, %vm124
    %v126 = vsel %vm125, %v118, %v122
    %v127 = vand.u32 2147483647, %v72
    %vm128 = vcmp.eq.f32.partialorder %v127, 8.507059e+37
    %v129 = vand.u32 %v72, 2147483648
    %v130 = vor.u32 1.1754944e-38, %v129
    %v131 = vsel %vm128, %v130, %v126
    %v132 = vmul.f32 1.0, %v131
    %v133 = vsub.f32 1.0, %v87
    %v134 = vsub.f32 1.0, %v102
    %v135 = vsub.f32 1.0, %v117
    %v136 = vsub.f32 1.0, %v132
    %v137 = vadd.f32 %v133, 0.05
    %v138 = vadd.f32 %v134, 0.05
    %v139 = vadd.f32 %v135, 0.05
    %v140 = vadd.f32 %v136, 0.05
    %v141 = vmin.f32 %v137, 1.0
    %v142 = vmin.f32 %v138, 1.0
    %v143 = vmin.f32 %v139, 1.0
    %v144 = vmin.f32 %v140, 1.0
    %v145 = vmax.f32 %v87, 1e-08
    %v146 = vmax.f32 %v102, 1e-08
    %v147 = vmax.f32 %v117, 1e-08
    %v148 = vmax.f32 %v132, 1e-08
    %v149 = vmax.f32 %v141, 1e-08
    %v150 = vmax.f32 %v142, 1e-08
    %v151 = vmax.f32 %v143, 1e-08
    %v152 = vmax.f32 %v144, 1e-08
    %vm153 = vcmp.gt.f32.partialorder %v53, 0.0
    %vm154 = vcmp.gt.f32.partialorder %v54, 0.0
    %vm155 = vcmp.gt.f32.partialorder %v55, 0.0
    %vm156 = vcmp.gt.f32.partialorder %v56, 0.0
    %v157 = vsel %vm153, %v145, %v149
    %v158 = vsel %vm154, %v146, %v150
    %v159 = vsel %vm155, %v147, %v151
    %v160 = vsel %vm156, %v148, %v152
    %v161 = vlog2.pop %v157
    %v162 = vmul.f32 %v161, 0.6931472
    %v163 = vlog2.pop %v158
    %v164 = vmul.f32 %v163, 0.6931472
    %v165 = vlog2.pop %v159
    %v166 = vmul.f32 %v165, 0.6931472
    %v167 = vlog2.pop %v160
    %v168 = vmul.f32 %v167, 0.6931472
    %v169 = vsub.f32 1.0, %v145
    %v170 = vsub.f32 1.0, %v146
    %v171 = vsub.f32 1.0, %v147
    %v172 = vsub.f32 1.0, %v148
    %v173 = vadd.f32 %v162, %v169
    %v174 = vadd.f32 %v164, %v170
    %v175 = vadd.f32 %v166, %v171
    %v176 = vadd.f32 %v168, %v172
    %v177 = vmul.f32 %v169, -1.25
    %v178 = vmul.f32 %v170, -1.25
    %v179 = vmul.f32 %v171, -1.25
    %v180 = vmul.f32 %v172, -1.25
    %v181 = vmul.f32 %v177, %v169
    %v182 = vmul.f32 %v178, %v170
    %v183 = vmul.f32 %v179, %v171
    %v184 = vmul.f32 %v180, %v172
    %v185 = vadd.f32 %v173, %v181
    %v186 = vadd.f32 %v174, %v182
    %v187 = vadd.f32 %v175, %v183
    %v188 = vadd.f32 %v176, %v184
    %v189 = vmul.f32 %v53, %v185
    %v190 = vmul.f32 %v54, %v186
    %v191 = vmul.f32 %v55, %v187
    %v192 = vmul.f32 %v56, %v188
    %v193 = vsub.f32 1.0, %v53
    %v194 = vsub.f32 1.0, %v54
    %v195 = vsub.f32 1.0, %v55
    %v196 = vsub.f32 1.0, %v56
    %v197 = vmul.f32 %v193, %v162
    %v198 = vmul.f32 %v194, %v164
    %v199 = vmul.f32 %v195, %v166
    %v200 = vmul.f32 %v196, %v168
    %v201 = vsub.f32 1.5, %v87
    %v202 = vsub.f32 1.5, %v102
    %v203 = vsub.f32 1.5, %v117
    %v204 = vsub.f32 1.5, %v132
    %v205 = vmul.f32 %v197, %v201
    %v206 = vmul.f32 %v198, %v202
    %v207 = vmul.f32 %v199, %v203
    %v208 = vmul.f32 %v200, %v204
    %v209 = vmul.f32 %v87, %v87
    %v210 = vmul.f32 %v102, %v102
    %v211 = vmul.f32 %v117, %v117
    %v212 = vmul.f32 %v132, %v132
    %v213 = vmul.f32 %v205, %v209
    %v214 = vmul.f32 %v206, %v210
    %v215 = vmul.f32 %v207, %v211
    %v216 = vmul.f32 %v208, %v212
    %v217 = vsub.f32 1.5, %v141
    %v218 = vsub.f32 1.5, %v142
    %v219 = vsub.f32 1.5, %v143
    %v220 = vsub.f32 1.5, %v144
    %v221 = vmul.f32 %v213, %v217
    %v222 = vmul.f32 %v214, %v218
    %v223 = vmul.f32 %v215, %v219
    %v224 = vmul.f32 %v216, %v220
    %v225 = vsub.f32 1.0, %v141
    %v226 = vsub.f32 1.0, %v142
    %v227 = vsub.f32 1.0, %v143
    %v228 = vsub.f32 1.0, %v144
    %v229 = vmul.f32 %v225, %v225
    %v230 = vmul.f32 %v226, %v226
    %v231 = vmul.f32 %v227, %v227
    %v232 = vmul.f32 %v228, %v228
    %v233 = vmul.f32 %v229, %v229
    %v234 = vmul.f32 %v230, %v230
    %v235 = vmul.f32 %v231, %v231
    %v236 = vmul.f32 %v232, %v232
    %v237 = vmul.f32 %v221, %v233
    %v238 = vmul.f32 %v222, %v234
    %v239 = vmul.f32 %v223, %v235
    %v240 = vmul.f32 %v224, %v236
    %v241 = vadd.f32 %v189, %v237
    %v242 = vadd.f32 %v190, %v238
    %v243 = vadd.f32 %v191, %v239
    %v244 = vadd.f32 %v192, %v240
    %v245 = vadd.f32 %v241, %v243
    %v246 = vadd.f32 %v242, %v244
    %v247 = vld [vmem:[#allocation2] sm:$0xff]
    %v248 = vld [vmem:[#allocation2 + $0x8] sm:$0xff]
    %v249 = vadd.f32 %v247, %v245
    %v250 = vadd.f32 %v248, %v246
    %251 = vst [vmem:[#allocation2] sm:$0xff] %v249
    %252 = vst [vmem:[#allocation2 + $0x8] sm:$0xff] %v250
    // Predicated region
    $region22: #{ralloss.1} parent=1 // pred_check
      %p253 = pneg %p43
    $region23: #{ralloss.1} parent=1 // pred_check_branch
      %255 = sbr.rel (%p253) target = $region25
    $region24: #{ralloss.1} parent=1 // pred_region
      %v256 = vld [vmem:[#allocation2] sm:$0xff]
      %v257 = vld [vmem:[#allocation2 + $0x8] sm:$0xff]
      %v258 = vadd.f32 %v256, %v257
      %259 = vadd.xlane.f32.xlu0 %v258
      %v260 = vpop.xlane.xlu0 %259
      %v261 = vrot.slane %v260, 4
      %v262 = vadd.f32 %v260, %v261
      %v263 = vrot.slane %v262, 2
      %v264 = vadd.f32 %v262, %v263
      %v265 = vrot.slane %v264, 1
      %v266 = vadd.f32 %v264, %v265
      %s267 = vtos %v266
      %s268 = ssub.f32 0.0, %s267
      %v269 = vstv %s268
      %270 = vst [vmem:[%s2] sm:$0xff] %v269
    $region25: #{ralloss.1} parent=1 // pred_fallthru
      _
    // Predicated region
    $region26: #{ralloss.1} parent=1 // pred_check
      _
    $region27: #{ralloss.1} parent=1 // pred_check_branch
      %272 = sbr.rel (0) target = $region29
    $region28: #{ralloss.1} parent=1 // pred_region
      _
    $region29: #{ralloss.1} parent=1 // pred_fallthru
      _
    // Predicated region
    $region30: #{ralloss.1} parent=1 // pred_check
      _
    $region31: #{ralloss.1} parent=1 // pred_check_branch
      %274 = sbr.rel (0) target = $region33
    $region32: #{ralloss.1} parent=1 // pred_region
      _
    $region33: #{ralloss.1} parent=1 // pred_fallthru
      _
    %275 = vsyncpa [#allocation4], 1
    %276 = vsyncpa [#allocation6], 1

</llo_original>
